<compile_context>
chip_gen: v7x
topology: tpu7x:2x2x1
jax: 0.10.0
libtpu: 0.0.40
codegen_flags: <defaults>
</compile_context>

<pallas_src>
import inspect
from dataclasses import dataclass
from typing import Any, List, Optional, Tuple

import jax
import jax.numpy as jnp
from jax.experimental import pallas as pl
from jax.experimental.pallas import tpu as pltpu

# Set if pl.Buffered(1) is rejected at lowering time and the resident path falls
# back to default (double-buffered) pipelining — kept for diagnosability.
_BUFFERED_FALLBACK_ERROR = None


# --------------------------------------------------------------------------- #
# small helpers
# --------------------------------------------------------------------------- #
def _round_up(x, m):
    return ((x + m - 1) // m) * m


def _pad_to(a, shape):
    pads = [(0, t - s) for s, t in zip(a.shape, shape)]
    if any(hi for _, hi in pads):
        a = jnp.pad(a, pads)
    return a


def _chip_info():
    """Return (vmem_capacity_bytes, mxu_native_m) with conservative fallbacks."""
    kind = ""
    try:
        kind = jax.devices()[0].device_kind.lower()
    except Exception:                      # no accelerator visible -> defaults
        pass
    vmem = None
    if hasattr(pltpu, "get_tpu_info"):
        try:                               # hardware query; not available on all versions
            vmem = int(pltpu.get_tpu_info().vmem_capacity_bytes)
        except Exception:
            vmem = None
    if vmem is None:
        vmem = (64 << 20) if "v7" in kind else (128 << 20)
    mxu_m = 128 if "v5" in kind else 256   # v5e/v5p: 128x128 MXU; v6e/v7x: 256x256
    return vmem, mxu_m


def _supports_single_buffered_blockspec():
    """Explicit capability check for BlockSpec(pipeline_mode=pl.Buffered(1))."""
    if not hasattr(pl, "Buffered"):
        return False
    try:
        return "pipeline_mode" in inspect.signature(pl.BlockSpec).parameters
    except (TypeError, ValueError):
        return False


def _skip_flags(ks, skip_connections):
    """Per-middle-layer skip decision based on the ORIGINAL (unpadded) dims."""
    num_layers = len(ks) - 1
    flags = [False] * num_layers
    for i in range(1, num_layers - 1):
        same_shape = ks[i] == ks[i + 1]
        if isinstance(skip_connections, bool):          # bool before int!
            flags[i] = bool(skip_connections) and same_shape
        elif isinstance(skip_connections, int):
            flags[i] = same_shape and (i % skip_connections == 0)
    return flags


# --------------------------------------------------------------------------- #
# parameter pre-packing (hoisted out of the per-call path)
# --------------------------------------------------------------------------- #
@dataclass
class PackedParams:
    mode: str                    # "resident" or "stream"
    compute_dtype: Any
    ks: Tuple[int, ...]
    ks_pad: Tuple[int, ...]
    wb_bytes: int
    cap_used: int
    mxu_m: int
    weights: Optional[List] = None     # resident: list of padded [Kin_p, Kout_p]
    biases: Optional[List] = None      # resident: list of padded [1, Kout_p] f32
    w_stack: Any = None                # stream: [L, Kmax, Kmax]
    b_stack: Any = None                # stream: [L, 1, Kmax] f32
    kmax: Optional[int] = None


def pack_params(params, *, compute_dtype=None, mode=None):
    """Cast + zero-pad the weights ONCE so forward calls only read them inside
    the kernel (no per-call HBM round trip).

    params : list of (W, b), W: [in, out] (transposed vs torch.nn.Linear), b: [1, out]
    compute_dtype : MXU operand dtype (default: weight dtype).  bfloat16 is the
        native fast path on all TPU generations; f32 runs at reduced MXU rate and
        doubles weight HBM/VMEM bytes.
    mode : None (auto) | "resident" | "stream".
    """
    ks = tuple([params[0][0].shape[0]] + [w.shape[1] for (w, _) in params])
    num_layers = len(params)
    compute_dtype = jnp.dtype(params[0][0].dtype if compute_dtype is None
                              else compute_dtype)
    ks_pad = tuple(_round_up(k, 128) for k in ks)   # lane-dense feature dims
    csize = compute_dtype.itemsize

    vmem_cap, mxu_m = _chip_info()
    cap_used = int(vmem_cap * 7 // 8)               # ~112 MiB v5e/v6e, ~56 MiB v7x

    wb_bytes = sum(ks_pad[i] * ks_pad[i + 1] * csize + ks_pad[i + 1] * 4
                   for i in range(num_layers))
    if mode is None:
        # leave headroom for I/O tiles + f32 activation temporaries at mxu_m rows
        scratch_guess = mxu_m * max(ks_pad) * (8 + csize) + (4 << 20)
        mode = "resident" if 2 * wb_bytes + scratch_guess <= cap_used else "stream"

    packed = PackedParams(mode=mode, compute_dtype=compute_dtype, ks=ks,
                          ks_pad=ks_pad, wb_bytes=wb_bytes, cap_used=cap_used,
                          mxu_m=mxu_m)
    if mode == "resident":
        packed.weights, packed.biases = [], []
        for i, (w, b) in enumerate(params):
            packed.weights.append(_pad_to(jnp.asarray(w, compute_dtype),
                                          (ks_pad[i], ks_pad[i + 1])))
            packed.biases.append(_pad_to(jnp.asarray(b, jnp.float32).reshape(1, -1),
                                         (1, ks_pad[i + 1])))
    else:
        kmax = max(ks_pad)
        packed.kmax = kmax
        packed.w_stack = jnp.stack(
            [_pad_to(jnp.asarray(w, compute_dtype), (kmax, kmax))
             for (w, _) in params])
        packed.b_stack = jnp.stack(
            [_pad_to(jnp.asarray(b, jnp.float32).reshape(1, -1), (1, kmax))
             for (_, b) in params])
    return packed


# --------------------------------------------------------------------------- #
# kernels
# --------------------------------------------------------------------------- #
def _make_resident_kernel(num_layers, negative_slope, skip_flags, compute_dtype):
    """Fully fused MLP: all weights resident in VMEM, one batch tile per step."""
    use_max = 0.0 <= negative_slope <= 1.0   # max-form LeakyReLU valid only then

    def kernel(x_ref, *refs):
        out_ref = refs[-1]
        wb = refs[:-1]                        # interleaved: w0, b0, w1, b1, ...
        h = x_ref[...]                        # native dtype straight into the MXU
        for i in range(num_layers):
            w = wb[2 * i][...]
            b = wb[2 * i + 1][...]
            y = jnp.dot(h, w, preferred_element_type=jnp.float32)   # f32 accumulate
            y = y + b.astype(jnp.float32)
            if 1 <= i <= num_layers - 2:
                if use_max:
                    y = jnp.maximum(y, negative_slope * y)          # LeakyReLU, 2 VPU ops
                else:
                    y = jnp.where(y >= 0, y, negative_slope * y)
                if skip_flags[i]:
                    y = y + h.astype(jnp.float32)
            h = y.astype(compute_dtype) if i < num_layers - 1 else y
        out_ref[...] = h.astype(out_ref.dtype)

    return kernel


def _make_stream_kernel(negative_slope):
    """Layer-streaming MLP: layer index is an inner grid axis, one layer's
    weights in VMEM at a time, activation carried in a VMEM scratch."""
    use_max = 0.0 <= negative_slope <= 1.0

    def kernel(skip_ref, x_ref, w_ref, b_ref, out_ref, h_ref):
        l = pl.program_id(1)
        n_l = pl.num_programs(1)

        @pl.when(l == 0)                      # fresh batch tile: seed carried activation
        def _():
            h_ref[...] = x_ref[...]

        h = h_ref[...]
        y = jnp.dot(h, w_ref[0], preferred_element_type=jnp.float32)
        y = y + b_ref[0].astype(jnp.float32)

        if use_max:
            y_act = jnp.maximum(y, negative_slope * y)
        else:
            y_act = jnp.where(y >= 0, y, negative_slope * y)
        y_act = jnp.where(skip_ref[l] > 0, y_act + h.astype(jnp.float32), y_act)
        is_mid = jnp.logical_and(l >= 1, l <= n_l - 2)
        y = jnp.where(is_mid, y_act, y)       # first/last layer: plain affine

        @pl.when(l < n_l - 1)
        def _():
            h_ref[...] = y.astype(h_ref.dtype)

        @pl.when(l == n_l - 1)
        def _():
            out_ref[...] = y.astype(out_ref.dtype)

    return kernel


# --------------------------------------------------------------------------- #
# forward paths
# --------------------------------------------------------------------------- #
def _choose_tile(B, sublane, mxu_m, fits):
    """Pick tile_b first (MXU-native M), then pad the batch up to a multiple."""
    b_min = _round_up(B, sublane)
    if b_min <= mxu_m and fits(b_min):
        return b_min, b_min                   # whole batch, single grid step
    t = mxu_m
    while t > sublane and not fits(t):        # shrink preemptively if VMEM-tight
        t //= 2
    t = max(t, sublane)
    return t, _round_up(B, t)


def _forward_resident(x, p, negative_slope, skip_connections):
    global _BUFFERED_FALLBACK_ERROR
    B = x.shape[0]
    ks, ks_pad = p.ks, p.ks_pad
    num_layers = len(ks) - 1
    cdtype = p.compute_dtype
    csize = cdtype.itemsize
    out_dtype = x.dtype
    osize = jnp.dtype(out_dtype).itemsize
    sublane = 16 if csize == 2 else 8
    max_k = max(ks_pad)

    single_buf = _supports_single_buffered_blockspec()
    wb_factor = 1 if single_buf else 2        # default pipelining double-buffers weights

    def need_bytes(tile_b, factor):
        io = 2 * tile_b * (ks_pad[0] * csize + ks_pad[-1] * osize)   # double-buffered tiles
        act = tile_b * max_k * (8 + csize)    # f32 y + f32 temp + compute-dtype h
        return factor * p.wb_bytes + io + act + (2 << 20)

    def fits(tile_b):
        return need_bytes(tile_b, wb_factor) <= p.cap_used

    tile_b, b_pad = _choose_tile(B, sublane, p.mxu_m, fits)
    if not fits(tile_b):
        raise ValueError(
            "resident-weight path does not fit per-core VMEM "
            f"(need {need_bytes(tile_b, wb_factor)} B, budget {p.cap_used} B); "
            "pack with mode='stream'")

    x_p = _pad_to(x.astype(cdtype), (b_pad, ks_pad[0]))
    flat_args = [x_p]
    for w_p, b_p in zip(p.weights, p.biases):
        flat_args.extend([w_p, b_p])

    skip_flags = _skip_flags(ks, skip_connections)
    kernel = _make_resident_kernel(num_layers, negative_slope, skip_flags, cdtype)

    flops = sum(2 * b_pad * ks_pad[i] * ks_pad[i + 1] for i in range(num_layers))
    bytes_accessed = (b_pad * ks_pad[0] * csize + p.wb_bytes
                      + b_pad * ks_pad[-1] * osize)
    cost = pl.CostEstimate(flops=flops, transcendentals=0,
                           bytes_accessed=bytes_accessed)
    # batch sharded across v7x's 2 TensorCores only when compute-bound; otherwise
    # it would duplicate the resident-weight DMA per core
    batch_sem = "parallel" if flops > 300 * bytes_accessed else "arbitrary"

    def run(use_buffered):
        factor = 1 if use_buffered else 2
        vmem_limit = int(min(p.cap_used,
                             max(int(1.5 * need_bytes(tile_b, factor)), 32 << 20)))
        wb_kwargs = dict(pipeline_mode=pl.Buffered(1)) if use_buffered else {}
        in_specs = [pl.BlockSpec((tile_b, ks_pad[0]), lambda i: (i, 0))]
        for w_p, b_p in zip(p.weights, p.biases):
            # grid-invariant blocks: full weight/bias resident in VMEM
            in_specs.append(pl.BlockSpec(w_p.shape, lambda i: (0, 0), **wb_kwargs))
            in_specs.append(pl.BlockSpec(b_p.shape, lambda i: (0, 0), **wb_kwargs))
        fn = pl.pallas_call(
            kernel,
            out_shape=jax.ShapeDtypeStruct((b_pad, ks_pad[-1]), out_dtype),
            grid=(b_pad // tile_b,),
            in_specs=in_specs,
            out_specs=pl.BlockSpec((tile_b, ks_pad[-1]), lambda i: (i, 0)),
            compiler_params=pltpu.CompilerParams(
                dimension_semantics=(batch_sem,),
                vmem_limit_bytes=vmem_limit),
            cost_estimate=cost,
        )
        return fn(*flat_args)

    if single_buf:
        try:
            out_p = run(True)
        except Exception as e:                # Buffered(1) rejected by this lowering:
            _BUFFERED_FALLBACK_ERROR = e      # keep diagnosable, rerun with 2x-weight budget
            out_p = run(False)
    else:
        out_p = run(False)
    return out_p[:B, :ks[-1]]                 # strip padding outside the kernel


def _forward_stream(x, p, negative_slope, skip_connections):
    B = x.shape[0]
    ks = p.ks
    num_layers = len(ks) - 1
    kmax = p.kmax
    cdtype = p.compute_dtype
    csize = cdtype.itemsize
    out_dtype = x.dtype
    osize = jnp.dtype(out_dtype).itemsize
    sublane = 16 if csize == 2 else 8

    def need_bytes(tile_b):
        w_buf = 2 * kmax * kmax * csize + 2 * kmax * 4   # double-buffered layer weight+bias
        io = 2 * tile_b * kmax * (csize + osize)          # x tile + out tile
        act = tile_b * kmax * (8 + 2 * csize)             # f32 y (+temp) + h scratch + h copy
        return w_buf + io + act + (2 << 20)

    def fits(tile_b):
        return need_bytes(tile_b) <= p.cap_used

    tile_b, b_pad = _choose_tile(B, sublane, p.mxu_m, fits)
    if not fits(tile_b):
        raise ValueError(
            "layer-streaming path does not fit per-core VMEM even at "
            f"tile_b={tile_b}; model layers are too wide for this chip")

    x_p = _pad_to(x.astype(cdtype), (b_pad, kmax))
    skip_flags = jnp.asarray(
        [1 if f else 0 for f in _skip_flags(ks, skip_connections)], jnp.int32)
    kernel = _make_stream_kernel(negative_slope)

    n_btiles = b_pad // tile_b
    flops = 2 * b_pad * kmax * kmax * num_layers
    bytes_accessed = (b_pad * kmax * csize
                      + n_btiles * num_layers * kmax * kmax * csize
                      + b_pad * kmax * osize)
    cost = pl.CostEstimate(flops=flops, transcendentals=0,
                           bytes_accessed=bytes_accessed)
    batch_sem = "parallel" if flops > 300 * bytes_accessed else "arbitrary"
    vmem_limit = int(min(p.cap_used,
                         max(int(1.5 * need_bytes(tile_b)), 32 << 20)))

    fn = pl.pallas_call(
        kernel,
        out_shape=jax.ShapeDtypeStruct((b_pad, kmax), out_dtype),
        grid_spec=pltpu.PrefetchScalarGridSpec(
            num_scalar_prefetch=1,
            grid=(n_btiles, num_layers),
            in_specs=[
                pl.BlockSpec((tile_b, kmax), lambda bt, l, skip: (bt, 0)),
                pl.BlockSpec((1, kmax, kmax), lambda bt, l, skip: (l, 0, 0)),
                pl.BlockSpec((1, 1, kmax), lambda bt, l, skip: (l, 0, 0)),
            ],
            out_specs=pl.BlockSpec((tile_b, kmax), lambda bt, l, skip: (bt, 0)),
            scratch_shapes=[pltpu.VMEM((tile_b, kmax), cdtype)]),
        compiler_params=pltpu.CompilerParams(
            dimension_semantics=(batch_sem, "arbitrary"),
            vmem_limit_bytes=vmem_limit),
        cost_estimate=cost,
    )
    out_p = fn(skip_flags, x_p, p.w_stack, p.b_stack)
    return out_p[:B, :ks[-1]]


def leapfrog_forward(x, packed, *, negative_slope=0.01, skip_connections=False):
    """Fused LeapfrogModel forward.  `packed` comes from pack_params().

    A raw params list is also accepted (packed on the fly — slow path; prefer
    packing once and reusing for every call)."""
    if not isinstance(packed, PackedParams):
        packed = pack_params(packed)
    assert x.shape[1] == packed.ks[0], "input feature dim mismatch"
    if packed.mode == "resident":
        return _forward_resident(x, packed, negative_slope, skip_connections)
    return _forward_stream(x, packed, negative_slope, skip_connections)


# --------------------------------------------------------------------------- #
# init + pure-JAX reference
# --------------------------------------------------------------------------- #
def init_params(key, ks):
    """PyTorch-Linear-style init: U(-1/sqrt(fan_in), 1/sqrt(fan_in))."""
    params = []
    for i in range(len(ks) - 1):
        fan_in, fan_out = ks[i], ks[i + 1]
        key, kw, kb = jax.random.split(key, 3)
        bound = 1.0 / jnp.sqrt(float(fan_in))
        w = jax.random.uniform(kw, (fan_in, fan_out), jnp.float32, -bound, bound)
        b = jax.random.uniform(kb, (1, fan_out), jnp.float32, -bound, bound)
        params.append((w, b))
    return params


def reference_forward(x, params, negative_slope=0.01, skip_connections=False):
    """Pure-JAX reference matching the PyTorch forward() (bool or int skip)."""
    num_layers = len(params)
    h = x
    for i, (w, b) in enumerate(params):
        y = h @ w + b
        if 1 <= i <= num_layers - 2:
            y = jnp.where(y >= 0, y, negative_slope * y)
            if y.shape == h.shape:
                if isinstance(skip_connections, bool):
                    if skip_connections:
                        y = y + h
                elif isinstance(skip_connections, int) and i % skip_connections == 0:
                    y = y + h
        h = y
    return h


if __name__ == "__main__":
    ks = [4, 32, 32, 8]
    B = 8

    key = jax.random.PRNGKey(0)
    key, kx = jax.random.split(key)
    x = jax.random.normal(kx, (B, ks[0]), jnp.float32)
    params = init_params(key, ks)
    ref = reference_forward(x, params)

    # 1) f32 resident path (exact semantics) ----------------------------------
    packed_f32 = pack_params(params)                  # pre-pack once, reuse per call
    out = jax.block_until_ready(leapfrog_forward(x, packed_f32))
    assert out.shape == (B, ks[-1])
    assert jnp.allclose(out, ref, atol=1e-4, rtol=1e-4), "f32 resident mismatch"

    # 2) bool skip connections --------------------------------------------------
    out_skip = jax.block_until_ready(
        leapfrog_forward(x, packed_f32, skip_connections=True))
    ref_skip = reference_forward(x, params, skip_connections=True)
    assert jnp.allclose(out_skip, ref_skip, atol=1e-4, rtol=1e-4), "skip mismatch"

    # 3) bf16-operand / f32-accumulate MXU path (recommended fast path) --------
    packed_bf16 = pack_params(params, compute_dtype=jnp.bfloat16)
    out_bf16 = jax.block_until_ready(leapfrog_forward(x, packed_bf16))
    assert out_bf16.shape == (B, ks[-1])
    assert jnp.allclose(out_bf16, ref, atol=5e-2, rtol=5e-2), "bf16 mismatch"

    # 4) layer-streaming path (forced here; auto-selected when weights > VMEM) -
    packed_stream = pack_params(params, mode="stream")
    out_stream = jax.block_until_ready(leapfrog_forward(x, packed_stream))
    assert jnp.allclose(out_stream, ref, atol=1e-4, rtol=1e-4), "stream mismatch"
    out_stream_skip = jax.block_until_ready(
        leapfrog_forward(x, packed_stream, skip_connections=True))
    assert jnp.allclose(out_stream_skip, ref_skip, atol=1e-4, rtol=1e-4), \
        "stream skip mismatch"

    # 5) int-valued skip_connections mode (skip on middle layers with i % n == 0)
    ks2 = [4, 32, 32, 32, 8]
    key, kx2 = jax.random.split(key)
    x2 = jax.random.normal(kx2, (B, ks2[0]), jnp.float32)
    params2 = init_params(key, ks2)
    packed2 = pack_params(params2)
    out_int = jax.block_until_ready(
        leapfrog_forward(x2, packed2, skip_connections=2))
    ref_int = reference_forward(x2, params2, skip_connections=2)
    assert jnp.allclose(out_int, ref_int, atol=1e-4, rtol=1e-4), "int-skip mismatch"

    print("KERNEL_OK")
</pallas_src>

<mosaic_0001>
module attributes {stable_mosaic.version = 11 : i64} {
  func.func @kernel(%arg0: i32, %arg1: memref<8x128xf32, #tpu.memory_space<vmem>>, %arg2: memref<128x128xf32, #tpu.memory_space<vmem>>, %arg3: memref<1x128xf32, #tpu.memory_space<vmem>>, %arg4: memref<128x128xf32, #tpu.memory_space<vmem>>, %arg5: memref<1x128xf32, #tpu.memory_space<vmem>>, %arg6: memref<128x128xf32, #tpu.memory_space<vmem>>, %arg7: memref<1x128xf32, #tpu.memory_space<vmem>>, %arg8: memref<8x128xf32, #tpu.memory_space<vmem>>) attributes {dimension_semantics = [#tpu.dimension_semantics<arbitrary>], iteration_bounds = array<i64: 1>, scalar_prefetch = 0 : i64, scratch_operands = 0 : i64, tpu.core_type = #tpu.core_type<tc>, window_params = [{transform_indices = @transform_0, window_bounds = array<i64: 8, 128>}, {pipeline_mode = #tpu.pipeline_mode<synchronous>, transform_indices = @transform_1, window_bounds = array<i64: 128, 128>}, {pipeline_mode = #tpu.pipeline_mode<synchronous>, transform_indices = @transform_2, window_bounds = array<i64: 1, 128>}, {pipeline_mode = #tpu.pipeline_mode<synchronous>, transform_indices = @transform_3, window_bounds = array<i64: 128, 128>}, {pipeline_mode = #tpu.pipeline_mode<synchronous>, transform_indices = @transform_4, window_bounds = array<i64: 1, 128>}, {pipeline_mode = #tpu.pipeline_mode<synchronous>, transform_indices = @transform_5, window_bounds = array<i64: 128, 128>}, {pipeline_mode = #tpu.pipeline_mode<synchronous>, transform_indices = @transform_6, window_bounds = array<i64: 1, 128>}, {transform_indices = @transform_7, window_bounds = array<i64: 8, 128>}]} {
    %c0 = arith.constant 0 : index
    %c0_0 = arith.constant 0 : index
    %0 = vector.load %arg1[%c0, %c0_0] : memref<8x128xf32, #tpu.memory_space<vmem>>, vector<8x128xf32>
    %c0_1 = arith.constant 0 : index
    %c0_2 = arith.constant 0 : index
    %1 = vector.load %arg2[%c0_1, %c0_2] : memref<128x128xf32, #tpu.memory_space<vmem>>, vector<128x128xf32>
    %c0_3 = arith.constant 0 : index
    %c0_4 = arith.constant 0 : index
    %2 = vector.load %arg3[%c0_3, %c0_4] : memref<1x128xf32, #tpu.memory_space<vmem>>, vector<1x128xf32>
    %cst = arith.constant dense<0.000000e+00> : vector<8x128xf32>
    %3 = tpu.matmul %0, %1, %cst {dimension_numbers = #tpu.dot_dimension_numbers<[1], [0], [0], [1], [0, 0, 1, 1], [], []>} : vector<8x128xf32>, vector<128x128xf32>, vector<8x128xf32> -> vector<8x128xf32>
    %4 = vector.broadcast %2 : vector<1x128xf32> to vector<8x128xf32>
    %5 = arith.addf %3, %4 : vector<8x128xf32>
    %c0_5 = arith.constant 0 : index
    %c0_6 = arith.constant 0 : index
    %6 = vector.load %arg4[%c0_5, %c0_6] : memref<128x128xf32, #tpu.memory_space<vmem>>, vector<128x128xf32>
    %c0_7 = arith.constant 0 : index
    %c0_8 = arith.constant 0 : index
    %7 = vector.load %arg5[%c0_7, %c0_8] : memref<1x128xf32, #tpu.memory_space<vmem>>, vector<1x128xf32>
    %cst_9 = arith.constant dense<0.000000e+00> : vector<8x128xf32>
    %8 = tpu.matmul %5, %6, %cst_9 {dimension_numbers = #tpu.dot_dimension_numbers<[1], [0], [0], [1], [0, 0, 1, 1], [], []>} : vector<8x128xf32>, vector<128x128xf32>, vector<8x128xf32> -> vector<8x128xf32>
    %9 = vector.broadcast %7 : vector<1x128xf32> to vector<8x128xf32>
    %10 = arith.addf %8, %9 : vector<8x128xf32>
    %cst_10 = arith.constant 0.00999999977 : f32
    %11 = vector.broadcast %cst_10 : f32 to vector<8x128xf32>
    %12 = arith.mulf %11, %10 : vector<8x128xf32>
    %13 = arith.maximumf %10, %12 : vector<8x128xf32>
    %c0_11 = arith.constant 0 : index
    %c0_12 = arith.constant 0 : index
    %14 = vector.load %arg6[%c0_11, %c0_12] : memref<128x128xf32, #tpu.memory_space<vmem>>, vector<128x128xf32>
    %c0_13 = arith.constant 0 : index
    %c0_14 = arith.constant 0 : index
    %15 = vector.load %arg7[%c0_13, %c0_14] : memref<1x128xf32, #tpu.memory_space<vmem>>, vector<1x128xf32>
    %cst_15 = arith.constant dense<0.000000e+00> : vector<8x128xf32>
    %16 = tpu.matmul %13, %14, %cst_15 {dimension_numbers = #tpu.dot_dimension_numbers<[1], [0], [0], [1], [0, 0, 1, 1], [], []>} : vector<8x128xf32>, vector<128x128xf32>, vector<8x128xf32> -> vector<8x128xf32>
    %17 = vector.broadcast %15 : vector<1x128xf32> to vector<8x128xf32>
    %18 = arith.addf %16, %17 : vector<8x128xf32>
    %c0_16 = arith.constant 0 : index
    %c0_17 = arith.constant 0 : index
    %19 = vector.load %arg8[%c0_16, %c0_17] : memref<8x128xf32, #tpu.memory_space<vmem>>, vector<8x128xf32>
    tpu.vector_store %arg8[%c0_16, %c0_17], %18 {strides = array<i32>} : memref<8x128xf32, #tpu.memory_space<vmem>>, vector<8x128xf32>,
    return
  }
  func.func @transform_0(%arg0: i32) -> (i32, i32) {
    %c0_i32 = arith.constant 0 : i32
    %c0_i32_0 = arith.constant 0 : i32
    return %arg0, %c0_i32 : i32, i32
  }
  func.func @transform_1(%arg0: i32) -> (i32, i32) {
    %c0_i32 = arith.constant 0 : i32
    %c0_i32_0 = arith.constant 0 : i32
    %c0_i32_1 = arith.constant 0 : i32
    return %c0_i32, %c0_i32_0 : i32, i32
  }
  func.func @transform_2(%arg0: i32) -> (i32, i32) {
    %c0_i32 = arith.constant 0 : i32
    %c0_i32_0 = arith.constant 0 : i32
    %c0_i32_1 = arith.constant 0 : i32
    return %c0_i32, %c0_i32_0 : i32, i32
  }
  func.func @transform_3(%arg0: i32) -> (i32, i32) {
    %c0_i32 = arith.constant 0 : i32
    %c0_i32_0 = arith.constant 0 : i32
    %c0_i32_1 = arith.constant 0 : i32
    return %c0_i32, %c0_i32_0 : i32, i32
  }
  func.func @transform_4(%arg0: i32) -> (i32, i32) {
    %c0_i32 = arith.constant 0 : i32
    %c0_i32_0 = arith.constant 0 : i32
    %c0_i32_1 = arith.constant 0 : i32
    return %c0_i32, %c0_i32_0 : i32, i32
  }
  func.func @transform_5(%arg0: i32) -> (i32, i32) {
    %c0_i32 = arith.constant 0 : i32
    %c0_i32_0 = arith.constant 0 : i32
    %c0_i32_1 = arith.constant 0 : i32
    return %c0_i32, %c0_i32_0 : i32, i32
  }
  func.func @transform_6(%arg0: i32) -> (i32, i32) {
    %c0_i32 = arith.constant 0 : i32
    %c0_i32_0 = arith.constant 0 : i32
    %c0_i32_1 = arith.constant 0 : i32
    return %c0_i32, %c0_i32_0 : i32, i32
  }
  func.func @transform_7(%arg0: i32) -> (i32, i32) {
    %c0_i32 = arith.constant 0 : i32
    %c0_i32_0 = arith.constant 0 : i32
    return %arg0, %c0_i32 : i32, i32
  }
}

module attributes {stable_mosaic.version = 11 : i64} {
  func.func @kernel(%arg0: i32, %arg1: memref<8x128xf32, #tpu.memory_space<vmem>>, %arg2: memref<128x128xf32, #tpu.memory_space<vmem>>, %arg3: memref<1x128xf32, #tpu.memory_space<vmem>>, %arg4: memref<128x128xf32, #tpu.memory_space<vmem>>, %arg5: memref<1x128xf32, #tpu.memory_space<vmem>>, %arg6: memref<128x128xf32, #tpu.memory_space<vmem>>, %arg7: memref<1x128xf32, #tpu.memory_space<vmem>>, %arg8: memref<8x128xf32, #tpu.memory_space<vmem>>) attributes {dimension_semantics = [#tpu.dimension_semantics<arbitrary>], iteration_bounds = array<i64: 1>, scalar_prefetch = 0 : i64, scratch_operands = 0 : i64, tpu.core_type = #tpu.core_type<tc>, window_params = [{transform_indices = @transform_0, window_bounds = array<i64: 8, 128>}, {pipeline_mode = #tpu.pipeline_mode<synchronous>, transform_indices = @transform_1, window_bounds = array<i64: 128, 128>}, {pipeline_mode = #tpu.pipeline_mode<synchronous>, transform_indices = @transform_2, window_bounds = array<i64: 1, 128>}, {pipeline_mode = #tpu.pipeline_mode<synchronous>, transform_indices = @transform_3, window_bounds = array<i64: 128, 128>}, {pipeline_mode = #tpu.pipeline_mode<synchronous>, transform_indices = @transform_4, window_bounds = array<i64: 1, 128>}, {pipeline_mode = #tpu.pipeline_mode<synchronous>, transform_indices = @transform_5, window_bounds = array<i64: 128, 128>}, {pipeline_mode = #tpu.pipeline_mode<synchronous>, transform_indices = @transform_6, window_bounds = array<i64: 1, 128>}, {transform_indices = @transform_7, window_bounds = array<i64: 8, 128>}]} {
    %c0 = arith.constant 0 : index
    %c0_0 = arith.constant 0 : index
    %0 = vector.load %arg1[%c0, %c0_0] : memref<8x128xf32, #tpu.memory_space<vmem>>, vector<8x128xf32>
    %c0_1 = arith.constant 0 : index
    %c0_2 = arith.constant 0 : index
    %1 = vector.load %arg2[%c0_1, %c0_2] : memref<128x128xf32, #tpu.memory_space<vmem>>, vector<128x128xf32>
    %c0_3 = arith.constant 0 : index
    %c0_4 = arith.constant 0 : index
    %2 = vector.load %arg3[%c0_3, %c0_4] : memref<1x128xf32, #tpu.memory_space<vmem>>, vector<1x128xf32>
    %cst = arith.constant dense<0.000000e+00> : vector<8x128xf32>
    %3 = tpu.matmul %0, %1, %cst {dimension_numbers = #tpu.dot_dimension_numbers<[1], [0], [0], [1], [0, 0, 1, 1], [], []>} : vector<8x128xf32>, vector<128x128xf32>, vector<8x128xf32> -> vector<8x128xf32>
    %4 = vector.broadcast %2 : vector<1x128xf32> to vector<8x128xf32>
    %5 = arith.addf %3, %4 : vector<8x128xf32>
    %c0_5 = arith.constant 0 : index
    %c0_6 = arith.constant 0 : index
    %6 = vector.load %arg4[%c0_5, %c0_6] : memref<128x128xf32, #tpu.memory_space<vmem>>, vector<128x128xf32>
    %c0_7 = arith.constant 0 : index
    %c0_8 = arith.constant 0 : index
    %7 = vector.load %arg5[%c0_7, %c0_8] : memref<1x128xf32, #tpu.memory_space<vmem>>, vector<1x128xf32>
    %cst_9 = arith.constant dense<0.000000e+00> : vector<8x128xf32>
    %8 = tpu.matmul %5, %6, %cst_9 {dimension_numbers = #tpu.dot_dimension_numbers<[1], [0], [0], [1], [0, 0, 1, 1], [], []>} : vector<8x128xf32>, vector<128x128xf32>, vector<8x128xf32> -> vector<8x128xf32>
    %9 = vector.broadcast %7 : vector<1x128xf32> to vector<8x128xf32>
    %10 = arith.addf %8, %9 : vector<8x128xf32>
    %cst_10 = arith.constant 0.00999999977 : f32
    %11 = vector.broadcast %cst_10 : f32 to vector<8x128xf32>
    %12 = arith.mulf %11, %10 : vector<8x128xf32>
    %13 = arith.maximumf %10, %12 : vector<8x128xf32>
    %c0_11 = arith.constant 0 : index
    %c0_12 = arith.constant 0 : index
    %14 = vector.load %arg6[%c0_11, %c0_12] : memref<128x128xf32, #tpu.memory_space<vmem>>, vector<128x128xf32>
    %c0_13 = arith.constant 0 : index
    %c0_14 = arith.constant 0 : index
    %15 = vector.load %arg7[%c0_13, %c0_14] : memref<1x128xf32, #tpu.memory_space<vmem>>, vector<1x128xf32>
    %cst_15 = arith.constant dense<0.000000e+00> : vector<8x128xf32>
    %16 = tpu.matmul %13, %14, %cst_15 {dimension_numbers = #tpu.dot_dimension_numbers<[1], [0], [0], [1], [0, 0, 1, 1], [], []>} : vector<8x128xf32>, vector<128x128xf32>, vector<8x128xf32> -> vector<8x128xf32>
    %17 = vector.broadcast %15 : vector<1x128xf32> to vector<8x128xf32>
    %18 = arith.addf %16, %17 : vector<8x128xf32>
    %c0_16 = arith.constant 0 : index
    %c0_17 = arith.constant 0 : index
    %19 = vector.load %arg8[%c0_16, %c0_17] : memref<8x128xf32, #tpu.memory_space<vmem>>, vector<8x128xf32>
    tpu.vector_store %arg8[%c0_16, %c0_17], %18 {strides = array<i32>} : memref<8x128xf32, #tpu.memory_space<vmem>>, vector<8x128xf32>,
    return
  }
  func.func @transform_0(%arg0: i32) -> (i32, i32) {
    %c0_i32 = arith.constant 0 : i32
    %c0_i32_0 = arith.constant 0 : i32
    return %arg0, %c0_i32 : i32, i32
  }
  func.func @transform_1(%arg0: i32) -> (i32, i32) {
    %c0_i32 = arith.constant 0 : i32
    %c0_i32_0 = arith.constant 0 : i32
    %c0_i32_1 = arith.constant 0 : i32
    return %c0_i32, %c0_i32_0 : i32, i32
  }
  func.func @transform_2(%arg0: i32) -> (i32, i32) {
    %c0_i32 = arith.constant 0 : i32
    %c0_i32_0 = arith.constant 0 : i32
    %c0_i32_1 = arith.constant 0 : i32
    return %c0_i32, %c0_i32_0 : i32, i32
  }
  func.func @transform_3(%arg0: i32) -> (i32, i32) {
    %c0_i32 = arith.constant 0 : i32
    %c0_i32_0 = arith.constant 0 : i32
    %c0_i32_1 = arith.constant 0 : i32
    return %c0_i32, %c0_i32_0 : i32, i32
  }
  func.func @transform_4(%arg0: i32) -> (i32, i32) {
    %c0_i32 = arith.constant 0 : i32
    %c0_i32_0 = arith.constant 0 : i32
    %c0_i32_1 = arith.constant 0 : i32
    return %c0_i32, %c0_i32_0 : i32, i32
  }
  func.func @transform_5(%arg0: i32) -> (i32, i32) {
    %c0_i32 = arith.constant 0 : i32
    %c0_i32_0 = arith.constant 0 : i32
    %c0_i32_1 = arith.constant 0 : i32
    return %c0_i32, %c0_i32_0 : i32, i32
  }
  func.func @transform_6(%arg0: i32) -> (i32, i32) {
    %c0_i32 = arith.constant 0 : i32
    %c0_i32_0 = arith.constant 0 : i32
    %c0_i32_1 = arith.constant 0 : i32
    return %c0_i32, %c0_i32_0 : i32, i32
  }
  func.func @transform_7(%arg0: i32) -> (i32, i32) {
    %c0_i32 = arith.constant 0 : i32
    %c0_i32_0 = arith.constant 0 : i32
    return %arg0, %c0_i32 : i32, i32
  }
}

</mosaic_0001>

<llo_original>
// kernel: tpu_custom_call.1
$region0: #{tpu_custom_call.1}
  #allocation0 [shape = 'u32[]', space=smem, size = 0x4, offset = 0x4, fixed_abs, tag = 'smem constant byte address 0x4 - core index']
  #allocation1 [shape = 'u32[144,128]{1,0:T(1,128)}', space=vmem, size = 0x12000, scoped, tag = 'internal scratch']
  %s0 = inlined_call_operand.hbm [shape: f32[8,128], index: 0, kind: input, shape index: {}]
  %s1 = inlined_call_operand.hbm [shape: f32[128,128], index: 1, kind: input, shape index: {}]
  %s2 = inlined_call_operand.vmem [shape: f32[1,128], index: 2, kind: input, shape index: {}]
  %s3 = inlined_call_operand.hbm [shape: f32[128,128], index: 3, kind: input, shape index: {}]
  %s4 = inlined_call_operand.vmem [shape: f32[1,128], index: 4, kind: input, shape index: {}]
  %s5 = inlined_call_operand.hbm [shape: f32[128,128], index: 5, kind: input, shape index: {}]
  %s6 = inlined_call_operand.vmem [shape: f32[1,128], index: 6, kind: input, shape index: {}]
  %s7 = inlined_call_operand.hbm [shape: f32[8,128], index: 7, kind: output, shape index: {}]
  %s8 = sld [smem:[#allocation0]]
  $region54: #{tpu_custom_call.1} parent=0
    _
  %s10 = ssub.s32 1, %s8
  %s11 = scalar_select 0, %s10, %s8
  $region1: #{tpu_custom_call.1} parent=0
    #allocation2 [shape = 'u8[4096]{0}', space=vmem, size = 0x1000, scoped, tag = 'input window, operand 0, single buffered']
    #allocation3 [shape = 's32[1]{0}', space=sflag, size = 0x4, scoped, tag = 'scoped memory for tpu_custom_call.1']
    #allocation4 [shape = 's32[1]{0}', space=sflag, size = 0x4, scoped, tag = 'scoped memory for tpu_custom_call.1']
    #allocation5 [shape = 'u8[65536]{0}', space=vmem, size = 0x10000, scoped, tag = 'input window, operand 1, single buffered']
    #allocation6 [shape = 's32[1]{0}', space=sflag, size = 0x4, scoped, tag = 'scoped memory for tpu_custom_call.1']
    #allocation7 [shape = 'u8[65536]{0}', space=vmem, size = 0x10000, scoped, tag = 'input window, operand 3, single buffered']
    #allocation8 [shape = 'u8[65536]{0}', space=vmem, size = 0x10000, scoped, tag = 'input window, operand 5, single buffered']
    #allocation9 [shape = 's32[1]{0}', space=sflag, size = 0x4, scoped, tag = 'scoped memory for tpu_custom_call.1']
    #allocation10 [shape = 'u8[4096]{0}', space=vmem, size = 0x1000, scoped, tag = 'output window, operand 0, single buffered']
    %12 = vsyncpa [#allocation3], 0
    %13 = vsyncpa [#allocation6], 0
    %14 = vsyncpa [#allocation9], 0
    %15 = vsyncpa [#allocation4], 0
    // Predicated region
    $region2: #{tpu_custom_call.1} parent=1 // pred_check
      _
    $region3: #{tpu_custom_call.1} parent=1 // pred_check_branch
      %17 = sbr.rel (0) target = $region5
    $region4: #{tpu_custom_call.1} parent=1 // pred_region
      %s19 = ssub.s32 128, 128
      %20 = vsyncadd [#allocation3], %s19
      %s22 = sshll.u32 [#allocation2], 4
      %s23 = int_to_ptr.vmem [resolvable:$true] %s22
      %25 = dma.hbm_to_vmem [thread:$0]  %s0, 128, %s23, [#allocation3]
    $region5: #{tpu_custom_call.1} parent=1 // pred_fallthru
      _
    // Predicated region
    $region6: #{tpu_custom_call.1} parent=1 // pred_check
      _
    $region7: #{tpu_custom_call.1} parent=1 // pred_check_branch
      %27 = sbr.rel (0) target = $region9
    $region8: #{tpu_custom_call.1} parent=1 // pred_region
      %s29 = ssub.s32 2048, 2048
      %30 = vsyncadd [#allocation6], %s29
      %s31 = sshll.u32 [#allocation5], 4
      %s32 = int_to_ptr.vmem [resolvable:$true] %s31
      %37 = dma.hbm_to_vmem [thread:$0]  %s1, 2048, %s32, [#allocation6], 128, 128, 8
    $region9: #{tpu_custom_call.1} parent=1 // pred_fallthru
      _
    // Predicated region
    $region10: #{tpu_custom_call.1} parent=1 // pred_check
      _
    $region11: #{tpu_custom_call.1} parent=1 // pred_check_branch
      %39 = sbr.rel (0) target = $region13
    $region12: #{tpu_custom_call.1} parent=1 // pred_region
      _
    $region13: #{tpu_custom_call.1} parent=1 // pred_fallthru
      _
    // Predicated region
    $region14: #{tpu_custom_call.1} parent=1 // pred_check
      _
    $region15: #{tpu_custom_call.1} parent=1 // pred_check_branch
      %41 = sbr.rel (0) target = $region17
    $region16: #{tpu_custom_call.1} parent=1 // pred_region
      %s43 = ssub.s32 2048, 2048
      %44 = vsyncadd [#allocation6], %s43
      %s45 = sshll.u32 [#allocation7], 4
      %s46 = int_to_ptr.vmem [resolvable:$true] %s45
      %51 = dma.hbm_to_vmem [thread:$0]  %s3, 2048, %s46, [#allocation6], 128, 128, 8
    $region17: #{tpu_custom_call.1} parent=1 // pred_fallthru
      _
    // Predicated region
    $region18: #{tpu_custom_call.1} parent=1 // pred_check
      _
    $region19: #{tpu_custom_call.1} parent=1 // pred_check_branch
      %53 = sbr.rel (0) target = $region21
    $region20: #{tpu_custom_call.1} parent=1 // pred_region
      _
    $region21: #{tpu_custom_call.1} parent=1 // pred_fallthru
      _
    // Predicated region
    $region22: #{tpu_custom_call.1} parent=1 // pred_check
      _
    $region23: #{tpu_custom_call.1} parent=1 // pred_check_branch
      %55 = sbr.rel (0) target = $region25
    $region24: #{tpu_custom_call.1} parent=1 // pred_region
      %s57 = ssub.s32 2048, 2048
      %58 = vsyncadd [#allocation9], %s57
      %s59 = sshll.u32 [#allocation8], 4
      %s60 = int_to_ptr.vmem [resolvable:$true] %s59
      %65 = dma.hbm_to_vmem [thread:$0]  %s5, 2048, %s60, [#allocation9], 128, 128, 8
    $region25: #{tpu_custom_call.1} parent=1 // pred_fallthru
      _
    // Predicated region
    $region26: #{tpu_custom_call.1} parent=1 // pred_check
      _
    $region27: #{tpu_custom_call.1} parent=1 // pred_check_branch
      %67 = sbr.rel (0) target = $region29
    $region28: #{tpu_custom_call.1} parent=1 // pred_region
      _
    $region29: #{tpu_custom_call.1} parent=1 // pred_fallthru
      _
    // Predicated region
    $region30: #{tpu_custom_call.1} parent=1 // pred_check
      _
    $region31: #{tpu_custom_call.1} parent=1 // pred_check_branch
      %69 = sbr.rel (0) target = $region33
    $region32: #{tpu_custom_call.1} parent=1 // pred_region
      %70 = dma.done [#allocation3], 128
    $region33: #{tpu_custom_call.1} parent=1 // pred_fallthru
      _
    // Predicated region
    $region34: #{tpu_custom_call.1} parent=1 // pred_check
      _
    $region35: #{tpu_custom_call.1} parent=1 // pred_check_branch
      %72 = sbr.rel (0) target = $region37
    $region36: #{tpu_custom_call.1} parent=1 // pred_region
      %73 = dma.done [#allocation6], 2048
    $region37: #{tpu_custom_call.1} parent=1 // pred_fallthru
      _
    // Predicated region
    $region38: #{tpu_custom_call.1} parent=1 // pred_check
      _
    $region39: #{tpu_custom_call.1} parent=1 // pred_check_branch
      %75 = sbr.rel (0) target = $region41
    $region40: #{tpu_custom_call.1} parent=1 // pred_region
      %76 = dma.done [#allocation6], 2048
    $region41: #{tpu_custom_call.1} parent=1 // pred_fallthru
      _
    // Predicated region
    $region42: #{tpu_custom_call.1} parent=1 // pred_check
      _
    $region43: #{tpu_custom_call.1} parent=1 // pred_check_branch
      %78 = sbr.rel (0) target = $region45
    $region44: #{tpu_custom_call.1} parent=1 // pred_region
      %79 = dma.done [#allocation9], 2048
    $region45: #{tpu_custom_call.1} parent=1 // pred_fallthru
      _
    %v80 = vld [vmem:[#allocation2] sm:$0xff]
    %v81 = vld [vmem:[#allocation5] sm:$0xff]
    %v82 = vld [vmem:[#allocation5 + $0x8] sm:$0xff]
    %v83 = vld [vmem:[#allocation5 + $0x10] sm:$0xff]
    %v84 = vld [vmem:[#allocation5 + $0x18] sm:$0xff]
    %v85 = vld [vmem:[#allocation5 + $0x20] sm:$0xff]
    %v86 = vld [vmem:[#allocation5 + $0x28] sm:$0xff]
    %v87 = vld [vmem:[#allocation5 + $0x30] sm:$0xff]
    %v88 = vld [vmem:[#allocation5 + $0x38] sm:$0xff]
    %v89 = vld [vmem:[#allocation5 + $0x40] sm:$0xff]
    %v90 = vld [vmem:[#allocation5 + $0x48] sm:$0xff]
    %v91 = vld [vmem:[#allocation5 + $0x50] sm:$0xff]
    %v92 = vld [vmem:[#allocation5 + $0x58] sm:$0xff]
    %v93 = vld [vmem:[#allocation5 + $0x60] sm:$0xff]
    %v94 = vld [vmem:[#allocation5 + $0x68] sm:$0xff]
    %v95 = vld [vmem:[#allocation5 + $0x70] sm:$0xff]
    %v96 = vld [vmem:[#allocation5 + $0x78] sm:$0xff]
    %v97 = vld [vmem:[%s2] sm:$0x1]
    %v99 = vlaneseq
    %v100 = vshrl.u32 %v99, 7
    %v101 = vsub.s32 0, %v100
    %v102 = vrot.slane %v97, %v101
    %104 = vmatprep.subr.mxu0 0.0
    %105 = vmatpush1.msra.mxu0 %v81
    %106 = vmatprep.subr.mxu0 0.0
    %107 = vmatpush1.msra.mxu0 %v82
    %108 = vmatprep.subr.mxu0 0.0
    %109 = vmatpush1.msra.mxu0 %v83
    %110 = vmatprep.subr.mxu0 0.0
    %111 = vmatpush1.msra.mxu0 %v84
    %112 = vmatprep.subr.mxu0 0.0
    %113 = vmatpush1.msra.mxu0 %v85
    %114 = vmatprep.subr.mxu0 0.0
    %115 = vmatpush1.msra.mxu0 %v86
    %116 = vmatprep.subr.mxu0 0.0
    %117 = vmatpush1.msra.mxu0 %v87
    %118 = vmatprep.subr.mxu0 0.0
    %119 = vmatpush1.msra.mxu0 %v88
    %120 = vmatprep.subr.mxu0 0.0
    %121 = vmatpush1.msra.mxu0 %v89
    %122 = vmatprep.subr.mxu0 0.0
    %123 = vmatpush1.msra.mxu0 %v90
    %124 = vmatprep.subr.mxu0 0.0
    %125 = vmatpush1.msra.mxu0 %v91
    %126 = vmatprep.subr.mxu0 0.0
    %127 = vmatpush1.msra.mxu0 %v92
    %128 = vmatprep.subr.mxu0 0.0
    %129 = vmatpush1.msra.mxu0 %v93
    %130 = vmatprep.subr.mxu0 0.0
    %131 = vmatpush1.msra.mxu0 %v94
    %132 = vmatprep.subr.mxu0 0.0
    %133 = vmatpush1.msra.mxu0 %v95
    %134 = vmatprep.subr.mxu0 0.0
    %135 = vmatpush1.msra.mxu0 %v96
    %136 = vmatprep.subr.mxu0 0.0
    %137 = vmatpush1.msra.mxu0 0.0
    %138 = vmatprep.subr.mxu0 0.0
    %139 = vmatpush1.msra.mxu0 0.0
    %140 = vmatprep.subr.mxu0 0.0
    %141 = vmatpush1.msra.mxu0 0.0
    %142 = vmatprep.subr.mxu0 0.0
    %143 = vmatpush1.msra.mxu0 0.0
    %144 = vmatprep.subr.mxu0 0.0
    %145 = vmatpush1.msra.mxu0 0.0
    %146 = vmatprep.subr.mxu0 0.0
    %147 = vmatpush1.msra.mxu0 0.0
    %148 = vmatprep.subr.mxu0 0.0
    %149 = vmatpush1.msra.mxu0 0.0
    %150 = vmatprep.subr.mxu0 0.0
    %151 = vmatpush1.msra.mxu0 0.0
    %152 = vmatprep.subr.mxu0 0.0
    %153 = vmatpush1.msra.mxu0 0.0
    %154 = vmatprep.subr.mxu0 0.0
    %155 = vmatpush1.msra.mxu0 0.0
    %156 = vmatprep.subr.mxu0 0.0
    %157 = vmatpush1.msra.mxu0 0.0
    %158 = vmatprep.subr.mxu0 0.0
    %159 = vmatpush1.msra.mxu0 0.0
    %160 = vmatprep.subr.mxu0 0.0
    %161 = vmatpush1.msra.mxu0 0.0
    %162 = vmatprep.subr.mxu0 0.0
    %163 = vmatpush1.msra.mxu0 0.0
    %164 = vmatprep.subr.mxu0 0.0
    %165 = vmatpush1.msra.mxu0 0.0
    %166 = vmatprep.subr.mxu0 0.0
    %167 = vmatpush1.msra.mxu0 0.0
    %168 = vmatprep.mubr.f32.mxu0 0.0
    %169 = vmatmul.mubr.f32.gmra.mrb[0].mxu0 %v80
    %v170 = vpop.f32.mrb[0].mxu0
    %v171 = vadd.f32 %v102, %v170
    %v172 = vpop.f32.mrb[0].mxu0
    %173 = vdwg.mxu0
    %v174 = vld [vmem:[#allocation7] sm:$0xff]
    %v175 = vld [vmem:[#allocation7 + $0x8] sm:$0xff]
    %v176 = vld [vmem:[#allocation7 + $0x10] sm:$0xff]
    %v177 = vld [vmem:[#allocation7 + $0x18] sm:$0xff]
    %v178 = vld [vmem:[#allocation7 + $0x20] sm:$0xff]
    %v179 = vld [vmem:[#allocation7 + $0x28] sm:$0xff]
    %v180 = vld [vmem:[#allocation7 + $0x30] sm:$0xff]
    %v181 = vld [vmem:[#allocation7 + $0x38] sm:$0xff]
    %v182 = vld [vmem:[#allocation7 + $0x40] sm:$0xff]
    %v183 = vld [vmem:[#allocation7 + $0x48] sm:$0xff]
    %v184 = vld [vmem:[#allocation7 + $0x50] sm:$0xff]
    %v185 = vld [vmem:[#allocation7 + $0x58] sm:$0xff]
    %v186 = vld [vmem:[#allocation7 + $0x60] sm:$0xff]
    %v187 = vld [vmem:[#allocation7 + $0x68] sm:$0xff]
    %v188 = vld [vmem:[#allocation7 + $0x70] sm:$0xff]
    %v189 = vld [vmem:[#allocation7 + $0x78] sm:$0xff]
    %v190 = vld [vmem:[%s4] sm:$0x1]
    %v192 = vlaneseq
    %v193 = vshrl.u32 %v192, 7
    %v194 = vsub.s32 0, %v193
    %v195 = vrot.slane %v190, %v194
    %197 = vmatprep.subr.mxu0 0.0
    %198 = vmatpush1.msra.mxu0 %v174
    %199 = vmatprep.subr.mxu0 0.0
    %200 = vmatpush1.msra.mxu0 %v175
    %201 = vmatprep.subr.mxu0 0.0
    %202 = vmatpush1.msra.mxu0 %v176
    %203 = vmatprep.subr.mxu0 0.0
    %204 = vmatpush1.msra.mxu0 %v177
    %205 = vmatprep.subr.mxu0 0.0
    %206 = vmatpush1.msra.mxu0 %v178
    %207 = vmatprep.subr.mxu0 0.0
    %208 = vmatpush1.msra.mxu0 %v179
    %209 = vmatprep.subr.mxu0 0.0
    %210 = vmatpush1.msra.mxu0 %v180
    %211 = vmatprep.subr.mxu0 0.0
    %212 = vmatpush1.msra.mxu0 %v181
    %213 = vmatprep.subr.mxu0 0.0
    %214 = vmatpush1.msra.mxu0 %v182
    %215 = vmatprep.subr.mxu0 0.0
    %216 = vmatpush1.msra.mxu0 %v183
    %217 = vmatprep.subr.mxu0 0.0
    %218 = vmatpush1.msra.mxu0 %v184
    %219 = vmatprep.subr.mxu0 0.0
    %220 = vmatpush1.msra.mxu0 %v185
    %221 = vmatprep.subr.mxu0 0.0
    %222 = vmatpush1.msra.mxu0 %v186
    %223 = vmatprep.subr.mxu0 0.0
    %224 = vmatpush1.msra.mxu0 %v187
    %225 = vmatprep.subr.mxu0 0.0
    %226 = vmatpush1.msra.mxu0 %v188
    %227 = vmatprep.subr.mxu0 0.0
    %228 = vmatpush1.msra.mxu0 %v189
    %229 = vmatprep.subr.mxu0 0.0
    %230 = vmatpush1.msra.mxu0 0.0
    %231 = vmatprep.subr.mxu0 0.0
    %232 = vmatpush1.msra.mxu0 0.0
    %233 = vmatprep.subr.mxu0 0.0
    %234 = vmatpush1.msra.mxu0 0.0
    %235 = vmatprep.subr.mxu0 0.0
    %236 = vmatpush1.msra.mxu0 0.0
    %237 = vmatprep.subr.mxu0 0.0
    %238 = vmatpush1.msra.mxu0 0.0
    %239 = vmatprep.subr.mxu0 0.0
    %240 = vmatpush1.msra.mxu0 0.0
    %241 = vmatprep.subr.mxu0 0.0
    %242 = vmatpush1.msra.mxu0 0.0
    %243 = vmatprep.subr.mxu0 0.0
    %244 = vmatpush1.msra.mxu0 0.0
    %245 = vmatprep.subr.mxu0 0.0
    %246 = vmatpush1.msra.mxu0 0.0
    %247 = vmatprep.subr.mxu0 0.0
    %248 = vmatpush1.msra.mxu0 0.0
    %249 = vmatprep.subr.mxu0 0.0
    %250 = vmatpush1.msra.mxu0 0.0
    %251 = vmatprep.subr.mxu0 0.0
    %252 = vmatpush1.msra.mxu0 0.0
    %253 = vmatprep.subr.mxu0 0.0
    %254 = vmatpush1.msra.mxu0 0.0
    %255 = vmatprep.subr.mxu0 0.0
    %256 = vmatpush1.msra.mxu0 0.0
    %257 = vmatprep.subr.mxu0 0.0
    %258 = vmatpush1.msra.mxu0 0.0
    %259 = vmatprep.subr.mxu0 0.0
    %260 = vmatpush1.msra.mxu0 0.0
    %261 = vmatprep.mubr.f32.mxu0 0.0
    %262 = vmatmul.mubr.f32.gmra.mrb[0].mxu0 %v171
    %v263 = vpop.f32.mrb[0].mxu0
    %v264 = vadd.f32 %v195, %v263
    %v265 = vpop.f32.mrb[0].mxu0
    %266 = vdwg.mxu0
    %v267 = vmul.f32 %v264, 0.01
    %v268 = vmax.f32 %v264, %v267
    %v269 = vld [vmem:[#allocation8] sm:$0xff]
    %v270 = vld [vmem:[#allocation8 + $0x8] sm:$0xff]
    %v271 = vld [vmem:[#allocation8 + $0x10] sm:$0xff]
    %v272 = vld [vmem:[#allocation8 + $0x18] sm:$0xff]
    %v273 = vld [vmem:[#allocation8 + $0x20] sm:$0xff]
    %v274 = vld [vmem:[#allocation8 + $0x28] sm:$0xff]
    %v275 = vld [vmem:[#allocation8 + $0x30] sm:$0xff]
    %v276 = vld [vmem:[#allocation8 + $0x38] sm:$0xff]
    %v277 = vld [vmem:[#allocation8 + $0x40] sm:$0xff]
    %v278 = vld [vmem:[#allocation8 + $0x48] sm:$0xff]
    %v279 = vld [vmem:[#allocation8 + $0x50] sm:$0xff]
    %v280 = vld [vmem:[#allocation8 + $0x58] sm:$0xff]
    %v281 = vld [vmem:[#allocation8 + $0x60] sm:$0xff]
    %v282 = vld [vmem:[#allocation8 + $0x68] sm:$0xff]
    %v283 = vld [vmem:[#allocation8 + $0x70] sm:$0xff]
    %v284 = vld [vmem:[#allocation8 + $0x78] sm:$0xff]
    %v285 = vld [vmem:[%s6] sm:$0x1]
    %v287 = vlaneseq
    %v288 = vshrl.u32 %v287, 7
    %v289 = vsub.s32 0, %v288
    %v290 = vrot.slane %v285, %v289
    %292 = vmatprep.subr.mxu0 0.0
    %293 = vmatpush1.msra.mxu0 %v269
    %294 = vmatprep.subr.mxu0 0.0
    %295 = vmatpush1.msra.mxu0 %v270
    %296 = vmatprep.subr.mxu0 0.0
    %297 = vmatpush1.msra.mxu0 %v271
    %298 = vmatprep.subr.mxu0 0.0
    %299 = vmatpush1.msra.mxu0 %v272
    %300 = vmatprep.subr.mxu0 0.0
    %301 = vmatpush1.msra.mxu0 %v273
    %302 = vmatprep.subr.mxu0 0.0
    %303 = vmatpush1.msra.mxu0 %v274
    %304 = vmatprep.subr.mxu0 0.0
    %305 = vmatpush1.msra.mxu0 %v275
    %306 = vmatprep.subr.mxu0 0.0
    %307 = vmatpush1.msra.mxu0 %v276
    %308 = vmatprep.subr.mxu0 0.0
    %309 = vmatpush1.msra.mxu0 %v277
    %310 = vmatprep.subr.mxu0 0.0
    %311 = vmatpush1.msra.mxu0 %v278
    %312 = vmatprep.subr.mxu0 0.0
    %313 = vmatpush1.msra.mxu0 %v279
    %314 = vmatprep.subr.mxu0 0.0
    %315 = vmatpush1.msra.mxu0 %v280
    %316 = vmatprep.subr.mxu0 0.0
    %317 = vmatpush1.msra.mxu0 %v281
    %318 = vmatprep.subr.mxu0 0.0
    %319 = vmatpush1.msra.mxu0 %v282
    %320 = vmatprep.subr.mxu0 0.0
    %321 = vmatpush1.msra.mxu0 %v283
    %322 = vmatprep.subr.mxu0 0.0
    %323 = vmatpush1.msra.mxu0 %v284
    %324 = vmatprep.subr.mxu0 0.0
    %325 = vmatpush1.msra.mxu0 0.0
    %326 = vmatprep.subr.mxu0 0.0
    %327 = vmatpush1.msra.mxu0 0.0
    %328 = vmatprep.subr.mxu0 0.0
    %329 = vmatpush1.msra.mxu0 0.0
    %330 = vmatprep.subr.mxu0 0.0
    %331 = vmatpush1.msra.mxu0 0.0
    %332 = vmatprep.subr.mxu0 0.0
    %333 = vmatpush1.msra.mxu0 0.0
    %334 = vmatprep.subr.mxu0 0.0
    %335 = vmatpush1.msra.mxu0 0.0
    %336 = vmatprep.subr.mxu0 0.0
    %337 = vmatpush1.msra.mxu0 0.0
    %338 = vmatprep.subr.mxu0 0.0
    %339 = vmatpush1.msra.mxu0 0.0
    %340 = vmatprep.subr.mxu0 0.0
    %341 = vmatpush1.msra.mxu0 0.0
    %342 = vmatprep.subr.mxu0 0.0
    %343 = vmatpush1.msra.mxu0 0.0
    %344 = vmatprep.subr.mxu0 0.0
    %345 = vmatpush1.msra.mxu0 0.0
    %346 = vmatprep.subr.mxu0 0.0
    %347 = vmatpush1.msra.mxu0 0.0
    %348 = vmatprep.subr.mxu0 0.0
    %349 = vmatpush1.msra.mxu0 0.0
    %350 = vmatprep.subr.mxu0 0.0
    %351 = vmatpush1.msra.mxu0 0.0
    %352 = vmatprep.subr.mxu0 0.0
    %353 = vmatpush1.msra.mxu0 0.0
    %354 = vmatprep.subr.mxu0 0.0
    %355 = vmatpush1.msra.mxu0 0.0
    %356 = vmatprep.mubr.f32.mxu0 0.0
    %357 = vmatmul.mubr.f32.gmra.mrb[0].mxu0 %v268
    %v358 = vpop.f32.mrb[0].mxu0
    %v359 = vadd.f32 %v290, %v358
    %v360 = vpop.f32.mrb[0].mxu0
    %361 = vdwg.mxu0
    %362 = vst [vmem:[#allocation10] sm:$0xff] %v359
    // Predicated region
    $region46: #{tpu_custom_call.1} parent=1 // pred_check
      _
    $region47: #{tpu_custom_call.1} parent=1 // pred_check_branch
      %364 = sbr.rel (0) target = $region49
    $region48: #{tpu_custom_call.1} parent=1 // pred_region
      %s366 = ssub.s32 128, 128
      %367 = vsyncadd [#allocation4], %s366
      %s369 = sshll.u32 [#allocation10], 4
      %s370 = int_to_ptr.vmem [resolvable:$true] %s369
      %372 = dma.vmem_to_hbm [thread:$0]  %s370, 128, %s7, [#allocation4]
    $region49: #{tpu_custom_call.1} parent=1 // pred_fallthru
      _
    // Predicated region
    $region50: #{tpu_custom_call.1} parent=1 // pred_check
      _
    $region51: #{tpu_custom_call.1} parent=1 // pred_check_branch
      %374 = sbr.rel (0) target = $region53
    $region52: #{tpu_custom_call.1} parent=1 // pred_region
      %375 = dma.done [#allocation4], 128
    $region53: #{tpu_custom_call.1} parent=1 // pred_fallthru
      _
    %376 = vsyncpa [#allocation3], 1
    %377 = vsyncpa [#allocation6], 1
    %378 = vsyncpa [#allocation9], 1
    %379 = vsyncpa [#allocation4], 1

// kernel: tpu_custom_call.1
$region0: #{tpu_custom_call.1}
  #allocation0 [shape = 'u32[]', space=smem, size = 0x4, offset = 0x4, fixed_abs, tag = 'smem constant byte address 0x4 - core index']
  #allocation1 [shape = 'u32[144,128]{1,0:T(1,128)}', space=vmem, size = 0x12000, scoped, tag = 'internal scratch']
  %s0 = inlined_call_operand.hbm [shape: f32[8,128], index: 0, kind: input, shape index: {}]
  %s1 = inlined_call_operand.hbm [shape: f32[128,128], index: 1, kind: input, shape index: {}]
  %s2 = inlined_call_operand.vmem [shape: f32[1,128], index: 2, kind: input, shape index: {}]
  %s3 = inlined_call_operand.hbm [shape: f32[128,128], index: 3, kind: input, shape index: {}]
  %s4 = inlined_call_operand.vmem [shape: f32[1,128], index: 4, kind: input, shape index: {}]
  %s5 = inlined_call_operand.hbm [shape: f32[128,128], index: 5, kind: input, shape index: {}]
  %s6 = inlined_call_operand.vmem [shape: f32[1,128], index: 6, kind: input, shape index: {}]
  %s7 = inlined_call_operand.hbm [shape: f32[8,128], index: 7, kind: output, shape index: {}]
  %s8 = sld [smem:[#allocation0]]
  $region54: #{tpu_custom_call.1} parent=0
    _
  %s10 = ssub.s32 1, %s8
  %s11 = scalar_select 0, %s10, %s8
  $region1: #{tpu_custom_call.1} parent=0
    #allocation2 [shape = 'u8[4096]{0}', space=vmem, size = 0x1000, scoped, tag = 'input window, operand 0, single buffered']
    #allocation3 [shape = 's32[1]{0}', space=sflag, size = 0x4, scoped, tag = 'scoped memory for tpu_custom_call.1']
    #allocation4 [shape = 's32[1]{0}', space=sflag, size = 0x4, scoped, tag = 'scoped memory for tpu_custom_call.1']
    #allocation5 [shape = 'u8[65536]{0}', space=vmem, size = 0x10000, scoped, tag = 'input window, operand 1, single buffered']
    #allocation6 [shape = 's32[1]{0}', space=sflag, size = 0x4, scoped, tag = 'scoped memory for tpu_custom_call.1']
    #allocation7 [shape = 'u8[65536]{0}', space=vmem, size = 0x10000, scoped, tag = 'input window, operand 3, single buffered']
    #allocation8 [shape = 'u8[65536]{0}', space=vmem, size = 0x10000, scoped, tag = 'input window, operand 5, single buffered']
    #allocation9 [shape = 's32[1]{0}', space=sflag, size = 0x4, scoped, tag = 'scoped memory for tpu_custom_call.1']
    #allocation10 [shape = 'u8[4096]{0}', space=vmem, size = 0x1000, scoped, tag = 'output window, operand 0, single buffered']
    %12 = vsyncpa [#allocation3], 0
    %13 = vsyncpa [#allocation6], 0
    %14 = vsyncpa [#allocation9], 0
    %15 = vsyncpa [#allocation4], 0
    // Predicated region
    $region2: #{tpu_custom_call.1} parent=1 // pred_check
      _
    $region3: #{tpu_custom_call.1} parent=1 // pred_check_branch
      %17 = sbr.rel (0) target = $region5
    $region4: #{tpu_custom_call.1} parent=1 // pred_region
      %s19 = ssub.s32 128, 128
      %20 = vsyncadd [#allocation3], %s19
      %s22 = sshll.u32 [#allocation2], 4
      %s23 = int_to_ptr.vmem [resolvable:$true] %s22
      %25 = dma.hbm_to_vmem [thread:$0]  %s0, 128, %s23, [#allocation3]
    $region5: #{tpu_custom_call.1} parent=1 // pred_fallthru
      _
    // Predicated region
    $region6: #{tpu_custom_call.1} parent=1 // pred_check
      _
    $region7: #{tpu_custom_call.1} parent=1 // pred_check_branch
      %27 = sbr.rel (0) target = $region9
    $region8: #{tpu_custom_call.1} parent=1 // pred_region
      %s29 = ssub.s32 2048, 2048
      %30 = vsyncadd [#allocation6], %s29
      %s31 = sshll.u32 [#allocation5], 4
      %s32 = int_to_ptr.vmem [resolvable:$true] %s31
      %37 = dma.hbm_to_vmem [thread:$0]  %s1, 2048, %s32, [#allocation6], 128, 128, 8
    $region9: #{tpu_custom_call.1} parent=1 // pred_fallthru
      _
    // Predicated region
    $region10: #{tpu_custom_call.1} parent=1 // pred_check
      _
    $region11: #{tpu_custom_call.1} parent=1 // pred_check_branch
      %39 = sbr.rel (0) target = $region13
    $region12: #{tpu_custom_call.1} parent=1 // pred_region
      _
    $region13: #{tpu_custom_call.1} parent=1 // pred_fallthru
      _
    // Predicated region
    $region14: #{tpu_custom_call.1} parent=1 // pred_check
      _
    $region15: #{tpu_custom_call.1} parent=1 // pred_check_branch
      %41 = sbr.rel (0) target = $region17
    $region16: #{tpu_custom_call.1} parent=1 // pred_region
      %s43 = ssub.s32 2048, 2048
      %44 = vsyncadd [#allocation6], %s43
      %s45 = sshll.u32 [#allocation7], 4
      %s46 = int_to_ptr.vmem [resolvable:$true] %s45
      %51 = dma.hbm_to_vmem [thread:$0]  %s3, 2048, %s46, [#allocation6], 128, 128, 8
    $region17: #{tpu_custom_call.1} parent=1 // pred_fallthru
      _
    // Predicated region
    $region18: #{tpu_custom_call.1} parent=1 // pred_check
      _
    $region19: #{tpu_custom_call.1} parent=1 // pred_check_branch
      %53 = sbr.rel (0) target = $region21
    $region20: #{tpu_custom_call.1} parent=1 // pred_region
      _
    $region21: #{tpu_custom_call.1} parent=1 // pred_fallthru
      _
    // Predicated region
    $region22: #{tpu_custom_call.1} parent=1 // pred_check
      _
    $region23: #{tpu_custom_call.1} parent=1 // pred_check_branch
      %55 = sbr.rel (0) target = $region25
    $region24: #{tpu_custom_call.1} parent=1 // pred_region
      %s57 = ssub.s32 2048, 2048
      %58 = vsyncadd [#allocation9], %s57
      %s59 = sshll.u32 [#allocation8], 4
      %s60 = int_to_ptr.vmem [resolvable:$true] %s59
      %65 = dma.hbm_to_vmem [thread:$0]  %s5, 2048, %s60, [#allocation9], 128, 128, 8
    $region25: #{tpu_custom_call.1} parent=1 // pred_fallthru
      _
    // Predicated region
    $region26: #{tpu_custom_call.1} parent=1 // pred_check
      _
    $region27: #{tpu_custom_call.1} parent=1 // pred_check_branch
      %67 = sbr.rel (0) target = $region29
    $region28: #{tpu_custom_call.1} parent=1 // pred_region
      _
    $region29: #{tpu_custom_call.1} parent=1 // pred_fallthru
      _
    // Predicated region
    $region30: #{tpu_custom_call.1} parent=1 // pred_check
      _
    $region31: #{tpu_custom_call.1} parent=1 // pred_check_branch
      %69 = sbr.rel (0) target = $region33
    $region32: #{tpu_custom_call.1} parent=1 // pred_region
      %70 = dma.done [#allocation3], 128
    $region33: #{tpu_custom_call.1} parent=1 // pred_fallthru
      _
    // Predicated region
    $region34: #{tpu_custom_call.1} parent=1 // pred_check
      _
    $region35: #{tpu_custom_call.1} parent=1 // pred_check_branch
      %72 = sbr.rel (0) target = $region37
    $region36: #{tpu_custom_call.1} parent=1 // pred_region
      %73 = dma.done [#allocation6], 2048
    $region37: #{tpu_custom_call.1} parent=1 // pred_fallthru
      _
    // Predicated region
    $region38: #{tpu_custom_call.1} parent=1 // pred_check
      _
    $region39: #{tpu_custom_call.1} parent=1 // pred_check_branch
      %75 = sbr.rel (0) target = $region41
    $region40: #{tpu_custom_call.1} parent=1 // pred_region
      %76 = dma.done [#allocation6], 2048
    $region41: #{tpu_custom_call.1} parent=1 // pred_fallthru
      _
    // Predicated region
    $region42: #{tpu_custom_call.1} parent=1 // pred_check
      _
    $region43: #{tpu_custom_call.1} parent=1 // pred_check_branch
      %78 = sbr.rel (0) target = $region45
    $region44: #{tpu_custom_call.1} parent=1 // pred_region
      %79 = dma.done [#allocation9], 2048
    $region45: #{tpu_custom_call.1} parent=1 // pred_fallthru
      _
    %v80 = vld [vmem:[#allocation2] sm:$0xff]
    %v81 = vld [vmem:[#allocation5] sm:$0xff]
    %v82 = vld [vmem:[#allocation5 + $0x8] sm:$0xff]
    %v83 = vld [vmem:[#allocation5 + $0x10] sm:$0xff]
    %v84 = vld [vmem:[#allocation5 + $0x18] sm:$0xff]
    %v85 = vld [vmem:[#allocation5 + $0x20] sm:$0xff]
    %v86 = vld [vmem:[#allocation5 + $0x28] sm:$0xff]
    %v87 = vld [vmem:[#allocation5 + $0x30] sm:$0xff]
    %v88 = vld [vmem:[#allocation5 + $0x38] sm:$0xff]
    %v89 = vld [vmem:[#allocation5 + $0x40] sm:$0xff]
    %v90 = vld [vmem:[#allocation5 + $0x48] sm:$0xff]
    %v91 = vld [vmem:[#allocation5 + $0x50] sm:$0xff]
    %v92 = vld [vmem:[#allocation5 + $0x58] sm:$0xff]
    %v93 = vld [vmem:[#allocation5 + $0x60] sm:$0xff]
    %v94 = vld [vmem:[#allocation5 + $0x68] sm:$0xff]
    %v95 = vld [vmem:[#allocation5 + $0x70] sm:$0xff]
    %v96 = vld [vmem:[#allocation5 + $0x78] sm:$0xff]
    %v97 = vld [vmem:[%s2] sm:$0x1]
    %v99 = vlaneseq
    %v100 = vshrl.u32 %v99, 7
    %v101 = vsub.s32 0, %v100
    %v102 = vrot.slane %v97, %v101
    %104 = vmatprep.subr.mxu0 0.0
    %105 = vmatpush1.msra.mxu0 %v81
    %106 = vmatprep.subr.mxu0 0.0
    %107 = vmatpush1.msra.mxu0 %v82
    %108 = vmatprep.subr.mxu0 0.0
    %109 = vmatpush1.msra.mxu0 %v83
    %110 = vmatprep.subr.mxu0 0.0
    %111 = vmatpush1.msra.mxu0 %v84
    %112 = vmatprep.subr.mxu0 0.0
    %113 = vmatpush1.msra.mxu0 %v85
    %114 = vmatprep.subr.mxu0 0.0
    %115 = vmatpush1.msra.mxu0 %v86
    %116 = vmatprep.subr.mxu0 0.0
    %117 = vmatpush1.msra.mxu0 %v87
    %118 = vmatprep.subr.mxu0 0.0
    %119 = vmatpush1.msra.mxu0 %v88
    %120 = vmatprep.subr.mxu0 0.0
    %121 = vmatpush1.msra.mxu0 %v89
    %122 = vmatprep.subr.mxu0 0.0
    %123 = vmatpush1.msra.mxu0 %v90
    %124 = vmatprep.subr.mxu0 0.0
    %125 = vmatpush1.msra.mxu0 %v91
    %126 = vmatprep.subr.mxu0 0.0
    %127 = vmatpush1.msra.mxu0 %v92
    %128 = vmatprep.subr.mxu0 0.0
    %129 = vmatpush1.msra.mxu0 %v93
    %130 = vmatprep.subr.mxu0 0.0
    %131 = vmatpush1.msra.mxu0 %v94
    %132 = vmatprep.subr.mxu0 0.0
    %133 = vmatpush1.msra.mxu0 %v95
    %134 = vmatprep.subr.mxu0 0.0
    %135 = vmatpush1.msra.mxu0 %v96
    %136 = vmatprep.subr.mxu0 0.0
    %137 = vmatpush1.msra.mxu0 0.0
    %138 = vmatprep.subr.mxu0 0.0
    %139 = vmatpush1.msra.mxu0 0.0
    %140 = vmatprep.subr.mxu0 0.0
    %141 = vmatpush1.msra.mxu0 0.0
    %142 = vmatprep.subr.mxu0 0.0
    %143 = vmatpush1.msra.mxu0 0.0
    %144 = vmatprep.subr.mxu0 0.0
    %145 = vmatpush1.msra.mxu0 0.0
    %146 = vmatprep.subr.mxu0 0.0
    %147 = vmatpush1.msra.mxu0 0.0
    %148 = vmatprep.subr.mxu0 0.0
    %149 = vmatpush1.msra.mxu0 0.0
    %150 = vmatprep.subr.mxu0 0.0
    %151 = vmatpush1.msra.mxu0 0.0
    %152 = vmatprep.subr.mxu0 0.0
    %153 = vmatpush1.msra.mxu0 0.0
    %154 = vmatprep.subr.mxu0 0.0
    %155 = vmatpush1.msra.mxu0 0.0
    %156 = vmatprep.subr.mxu0 0.0
    %157 = vmatpush1.msra.mxu0 0.0
    %158 = vmatprep.subr.mxu0 0.0
    %159 = vmatpush1.msra.mxu0 0.0
    %160 = vmatprep.subr.mxu0 0.0
    %161 = vmatpush1.msra.mxu0 0.0
    %162 = vmatprep.subr.mxu0 0.0
    %163 = vmatpush1.msra.mxu0 0.0
    %164 = vmatprep.subr.mxu0 0.0
    %165 = vmatpush1.msra.mxu0 0.0
    %166 = vmatprep.subr.mxu0 0.0
    %167 = vmatpush1.msra.mxu0 0.0
    %168 = vmatprep.mubr.f32.mxu0 0.0
    %169 = vmatmul.mubr.f32.gmra.mrb[0].mxu0 %v80
    %v170 = vpop.f32.mrb[0].mxu0
    %v171 = vadd.f32 %v102, %v170
    %v172 = vpop.f32.mrb[0].mxu0
    %173 = vdwg.mxu0
    %v174 = vld [vmem:[#allocation7] sm:$0xff]
    %v175 = vld [vmem:[#allocation7 + $0x8] sm:$0xff]
    %v176 = vld [vmem:[#allocation7 + $0x10] sm:$0xff]
    %v177 = vld [vmem:[#allocation7 + $0x18] sm:$0xff]
    %v178 = vld [vmem:[#allocation7 + $0x20] sm:$0xff]
    %v179 = vld [vmem:[#allocation7 + $0x28] sm:$0xff]
    %v180 = vld [vmem:[#allocation7 + $0x30] sm:$0xff]
    %v181 = vld [vmem:[#allocation7 + $0x38] sm:$0xff]
    %v182 = vld [vmem:[#allocation7 + $0x40] sm:$0xff]
    %v183 = vld [vmem:[#allocation7 + $0x48] sm:$0xff]
    %v184 = vld [vmem:[#allocation7 + $0x50] sm:$0xff]
    %v185 = vld [vmem:[#allocation7 + $0x58] sm:$0xff]
    %v186 = vld [vmem:[#allocation7 + $0x60] sm:$0xff]
    %v187 = vld [vmem:[#allocation7 + $0x68] sm:$0xff]
    %v188 = vld [vmem:[#allocation7 + $0x70] sm:$0xff]
    %v189 = vld [vmem:[#allocation7 + $0x78] sm:$0xff]
    %v190 = vld [vmem:[%s4] sm:$0x1]
    %v192 = vlaneseq
    %v193 = vshrl.u32 %v192, 7
    %v194 = vsub.s32 0, %v193
    %v195 = vrot.slane %v190, %v194
    %197 = vmatprep.subr.mxu0 0.0
    %198 = vmatpush1.msra.mxu0 %v174
    %199 = vmatprep.subr.mxu0 0.0
    %200 = vmatpush1.msra.mxu0 %v175
    %201 = vmatprep.subr.mxu0 0.0
    %202 = vmatpush1.msra.mxu0 %v176
    %203 = vmatprep.subr.mxu0 0.0
    %204 = vmatpush1.msra.mxu0 %v177
    %205 = vmatprep.subr.mxu0 0.0
    %206 = vmatpush1.msra.mxu0 %v178
    %207 = vmatprep.subr.mxu0 0.0
    %208 = vmatpush1.msra.mxu0 %v179
    %209 = vmatprep.subr.mxu0 0.0
    %210 = vmatpush1.msra.mxu0 %v180
    %211 = vmatprep.subr.mxu0 0.0
    %212 = vmatpush1.msra.mxu0 %v181
    %213 = vmatprep.subr.mxu0 0.0
    %214 = vmatpush1.msra.mxu0 %v182
    %215 = vmatprep.subr.mxu0 0.0
    %216 = vmatpush1.msra.mxu0 %v183
    %217 = vmatprep.subr.mxu0 0.0
    %218 = vmatpush1.msra.mxu0 %v184
    %219 = vmatprep.subr.mxu0 0.0
    %220 = vmatpush1.msra.mxu0 %v185
    %221 = vmatprep.subr.mxu0 0.0
    %222 = vmatpush1.msra.mxu0 %v186
    %223 = vmatprep.subr.mxu0 0.0
    %224 = vmatpush1.msra.mxu0 %v187
    %225 = vmatprep.subr.mxu0 0.0
    %226 = vmatpush1.msra.mxu0 %v188
    %227 = vmatprep.subr.mxu0 0.0
    %228 = vmatpush1.msra.mxu0 %v189
    %229 = vmatprep.subr.mxu0 0.0
    %230 = vmatpush1.msra.mxu0 0.0
    %231 = vmatprep.subr.mxu0 0.0
    %232 = vmatpush1.msra.mxu0 0.0
    %233 = vmatprep.subr.mxu0 0.0
    %234 = vmatpush1.msra.mxu0 0.0
    %235 = vmatprep.subr.mxu0 0.0
    %236 = vmatpush1.msra.mxu0 0.0
    %237 = vmatprep.subr.mxu0 0.0
    %238 = vmatpush1.msra.mxu0 0.0
    %239 = vmatprep.subr.mxu0 0.0
    %240 = vmatpush1.msra.mxu0 0.0
    %241 = vmatprep.subr.mxu0 0.0
    %242 = vmatpush1.msra.mxu0 0.0
    %243 = vmatprep.subr.mxu0 0.0
    %244 = vmatpush1.msra.mxu0 0.0
    %245 = vmatprep.subr.mxu0 0.0
    %246 = vmatpush1.msra.mxu0 0.0
    %247 = vmatprep.subr.mxu0 0.0
    %248 = vmatpush1.msra.mxu0 0.0
    %249 = vmatprep.subr.mxu0 0.0
    %250 = vmatpush1.msra.mxu0 0.0
    %251 = vmatprep.subr.mxu0 0.0
    %252 = vmatpush1.msra.mxu0 0.0
    %253 = vmatprep.subr.mxu0 0.0
    %254 = vmatpush1.msra.mxu0 0.0
    %255 = vmatprep.subr.mxu0 0.0
    %256 = vmatpush1.msra.mxu0 0.0
    %257 = vmatprep.subr.mxu0 0.0
    %258 = vmatpush1.msra.mxu0 0.0
    %259 = vmatprep.subr.mxu0 0.0
    %260 = vmatpush1.msra.mxu0 0.0
    %261 = vmatprep.mubr.f32.mxu0 0.0
    %262 = vmatmul.mubr.f32.gmra.mrb[0].mxu0 %v171
    %v263 = vpop.f32.mrb[0].mxu0
    %v264 = vadd.f32 %v195, %v263
    %v265 = vpop.f32.mrb[0].mxu0
    %266 = vdwg.mxu0
    %v267 = vmul.f32 %v264, 0.01
    %v268 = vmax.f32 %v264, %v267
    %v269 = vld [vmem:[#allocation8] sm:$0xff]
    %v270 = vld [vmem:[#allocation8 + $0x8] sm:$0xff]
    %v271 = vld [vmem:[#allocation8 + $0x10] sm:$0xff]
    %v272 = vld [vmem:[#allocation8 + $0x18] sm:$0xff]
    %v273 = vld [vmem:[#allocation8 + $0x20] sm:$0xff]
    %v274 = vld [vmem:[#allocation8 + $0x28] sm:$0xff]
    %v275 = vld [vmem:[#allocation8 + $0x30] sm:$0xff]
    %v276 = vld [vmem:[#allocation8 + $0x38] sm:$0xff]
    %v277 = vld [vmem:[#allocation8 + $0x40] sm:$0xff]
    %v278 = vld [vmem:[#allocation8 + $0x48] sm:$0xff]
    %v279 = vld [vmem:[#allocation8 + $0x50] sm:$0xff]
    %v280 = vld [vmem:[#allocation8 + $0x58] sm:$0xff]
    %v281 = vld [vmem:[#allocation8 + $0x60] sm:$0xff]
    %v282 = vld [vmem:[#allocation8 + $0x68] sm:$0xff]
    %v283 = vld [vmem:[#allocation8 + $0x70] sm:$0xff]
    %v284 = vld [vmem:[#allocation8 + $0x78] sm:$0xff]
    %v285 = vld [vmem:[%s6] sm:$0x1]
    %v287 = vlaneseq
    %v288 = vshrl.u32 %v287, 7
    %v289 = vsub.s32 0, %v288
    %v290 = vrot.slane %v285, %v289
    %292 = vmatprep.subr.mxu0 0.0
    %293 = vmatpush1.msra.mxu0 %v269
    %294 = vmatprep.subr.mxu0 0.0
    %295 = vmatpush1.msra.mxu0 %v270
    %296 = vmatprep.subr.mxu0 0.0
    %297 = vmatpush1.msra.mxu0 %v271
    %298 = vmatprep.subr.mxu0 0.0
    %299 = vmatpush1.msra.mxu0 %v272
    %300 = vmatprep.subr.mxu0 0.0
    %301 = vmatpush1.msra.mxu0 %v273
    %302 = vmatprep.subr.mxu0 0.0
    %303 = vmatpush1.msra.mxu0 %v274
    %304 = vmatprep.subr.mxu0 0.0
    %305 = vmatpush1.msra.mxu0 %v275
    %306 = vmatprep.subr.mxu0 0.0
    %307 = vmatpush1.msra.mxu0 %v276
    %308 = vmatprep.subr.mxu0 0.0
    %309 = vmatpush1.msra.mxu0 %v277
    %310 = vmatprep.subr.mxu0 0.0
    %311 = vmatpush1.msra.mxu0 %v278
    %312 = vmatprep.subr.mxu0 0.0
    %313 = vmatpush1.msra.mxu0 %v279
    %314 = vmatprep.subr.mxu0 0.0
    %315 = vmatpush1.msra.mxu0 %v280
    %316 = vmatprep.subr.mxu0 0.0
    %317 = vmatpush1.msra.mxu0 %v281
    %318 = vmatprep.subr.mxu0 0.0
    %319 = vmatpush1.msra.mxu0 %v282
    %320 = vmatprep.subr.mxu0 0.0
    %321 = vmatpush1.msra.mxu0 %v283
    %322 = vmatprep.subr.mxu0 0.0
    %323 = vmatpush1.msra.mxu0 %v284
    %324 = vmatprep.subr.mxu0 0.0
    %325 = vmatpush1.msra.mxu0 0.0
    %326 = vmatprep.subr.mxu0 0.0
    %327 = vmatpush1.msra.mxu0 0.0
    %328 = vmatprep.subr.mxu0 0.0
    %329 = vmatpush1.msra.mxu0 0.0
    %330 = vmatprep.subr.mxu0 0.0
    %331 = vmatpush1.msra.mxu0 0.0
    %332 = vmatprep.subr.mxu0 0.0
    %333 = vmatpush1.msra.mxu0 0.0
    %334 = vmatprep.subr.mxu0 0.0
    %335 = vmatpush1.msra.mxu0 0.0
    %336 = vmatprep.subr.mxu0 0.0
    %337 = vmatpush1.msra.mxu0 0.0
    %338 = vmatprep.subr.mxu0 0.0
    %339 = vmatpush1.msra.mxu0 0.0
    %340 = vmatprep.subr.mxu0 0.0
    %341 = vmatpush1.msra.mxu0 0.0
    %342 = vmatprep.subr.mxu0 0.0
    %343 = vmatpush1.msra.mxu0 0.0
    %344 = vmatprep.subr.mxu0 0.0
    %345 = vmatpush1.msra.mxu0 0.0
    %346 = vmatprep.subr.mxu0 0.0
    %347 = vmatpush1.msra.mxu0 0.0
    %348 = vmatprep.subr.mxu0 0.0
    %349 = vmatpush1.msra.mxu0 0.0
    %350 = vmatprep.subr.mxu0 0.0
    %351 = vmatpush1.msra.mxu0 0.0
    %352 = vmatprep.subr.mxu0 0.0
    %353 = vmatpush1.msra.mxu0 0.0
    %354 = vmatprep.subr.mxu0 0.0
    %355 = vmatpush1.msra.mxu0 0.0
    %356 = vmatprep.mubr.f32.mxu0 0.0
    %357 = vmatmul.mubr.f32.gmra.mrb[0].mxu0 %v268
    %v358 = vpop.f32.mrb[0].mxu0
    %v359 = vadd.f32 %v290, %v358
    %v360 = vpop.f32.mrb[0].mxu0
    %361 = vdwg.mxu0
    %362 = vst [vmem:[#allocation10] sm:$0xff] %v359
    // Predicated region
    $region46: #{tpu_custom_call.1} parent=1 // pred_check
      _
    $region47: #{tpu_custom_call.1} parent=1 // pred_check_branch
      %364 = sbr.rel (0) target = $region49
    $region48: #{tpu_custom_call.1} parent=1 // pred_region
      %s366 = ssub.s32 128, 128
      %367 = vsyncadd [#allocation4], %s366
      %s369 = sshll.u32 [#allocation10], 4
      %s370 = int_to_ptr.vmem [resolvable:$true] %s369
      %372 = dma.vmem_to_hbm [thread:$0]  %s370, 128, %s7, [#allocation4]
    $region49: #{tpu_custom_call.1} parent=1 // pred_fallthru
      _
    // Predicated region
    $region50: #{tpu_custom_call.1} parent=1 // pred_check
      _
    $region51: #{tpu_custom_call.1} parent=1 // pred_check_branch
      %374 = sbr.rel (0) target = $region53
    $region52: #{tpu_custom_call.1} parent=1 // pred_region
      %375 = dma.done [#allocation4], 128
    $region53: #{tpu_custom_call.1} parent=1 // pred_fallthru
      _
    %376 = vsyncpa [#allocation3], 1
    %377 = vsyncpa [#allocation6], 1
    %378 = vsyncpa [#allocation9], 1
    %379 = vsyncpa [#allocation4], 1

</llo_original>
